<compile_context>
chip_gen: v5e
topology: v5e:2x2
jax: 0.10.0
libtpu: 0.0.40
codegen_flags: <defaults>
</compile_context>

<pallas_src>
import jax
import jax.numpy as jnp
from jax.experimental import pallas as pl
from jax.experimental.pallas import tpu as pltpu

LANES = 128      # TPU lane width: M tiles sit on the lane axis.
SUBLANES = 8     # f32 sublane tile: Cout is padded to a multiple of this.


def conv3x3_gemm_t_kernel(w_ref, x_ref, b_ref, o_ref):
    # w_ref: (COP, K)  bf16  resident weights (constant index_map)
    # x_ref: (K, TM)   bf16  streaming im2col columns, TM on the lane axis
    # b_ref: (COP, 1)  f32   resident bias
    # o_ref: (COP, TM) f32   lane-dense output tile (unmasked vst)
    acc = jnp.dot(w_ref[...], x_ref[...], preferred_element_type=jnp.float32)
    o_ref[...] = (acc + b_ref[...]).astype(o_ref.dtype)


def _pick_tile_m(M, tm_max=1024, min_steps=4):
    """Largest lane-multiple tile <= tm_max that still yields >= min_steps grid
    steps when M is big enough (>= 2 steps per v7x TensorCore). Always >= LANES.
    tm_max=1024 keeps the double-buffered working set well under the scoped
    VMEM limits of every generation (v5e 16 MiB, v6e/v7x 32 MiB)."""
    tm = (M // min_steps) // LANES * LANES
    return max(LANES, min(tm_max, tm))


def outconv_forward(x_nchw, weight, bias):
    """Equivalent of nn.Conv2d(in_ch, out_ch, kernel_size=3, padding=1)(x).

    x_nchw: (N, Cin, H, W) float32
    weight: (Cout, Cin, 3, 3) float32  (PyTorch OIHW layout)
    bias:   (Cout,) float32
    returns (N, Cout, H, W) float32
    """
    N, Cin, H, W = x_nchw.shape
    Cout = weight.shape[0]
    K = Cin * 9
    COP = ((Cout + SUBLANES - 1) // SUBLANES) * SUBLANES   # sublane-padded Cout
    M = N * H * W

    # ---- wrapper glue (plain JAX): pad, im2col (transposed), weight relayout ----
    # TODO(synk): for production UNet shapes, fuse pad/im2col into the kernel
    # (halo-strip DMA into VMEM + static shifted views feeding one matmul) to
    # avoid the 9x HBM blowup of materializing x_t; at these toy shapes the
    # GEMM orientation and writeback size dominate instead.
    x_nhwc = jnp.transpose(x_nchw, (0, 2, 3, 1))                 # (N, H, W, Cin)
    x_pad = jnp.pad(x_nhwc, ((0, 0), (1, 1), (1, 1), (0, 0)))    # (N, H+2, W+2, Cin)
    patches = jnp.stack(
        [x_pad[:, kh:kh + H, kw:kw + W, :] for kh in range(3) for kw in range(3)],
        axis=0)                                                  # (9, N, H, W, Cin)
    # K ordered [kh, kw, cin] on sublanes; M = (n, h, w) on lanes.
    x_t = jnp.transpose(patches, (0, 4, 1, 2, 3)).reshape(K, M)

    TM = _pick_tile_m(M)
    MP = pl.cdiv(M, TM) * TM                                     # lane-padded M

    x_t = jnp.zeros((K, MP), jnp.bfloat16).at[:, :M].set(x_t.astype(jnp.bfloat16))

    # (Cout, Cin, kh, kw) -> (Cout, kh, kw, Cin) -> (Cout, K); pad Cout -> COP.
    w_mat = jnp.transpose(weight, (0, 2, 3, 1)).reshape(Cout, K)
    w_pad = jnp.zeros((COP, K), jnp.bfloat16).at[:Cout, :].set(
        w_mat.astype(jnp.bfloat16))
    b_pad = jnp.zeros((COP, 1), jnp.float32).at[:Cout, 0].set(bias)

    grid = (MP // TM,)

    out_t = pl.pallas_call(
        conv3x3_gemm_t_kernel,
        out_shape=jax.ShapeDtypeStruct((COP, MP), jnp.float32),
        grid_spec=pl.GridSpec(
            grid=grid,
            in_specs=[
                pl.BlockSpec((COP, K), lambda m: (0, 0)),   # weights, resident
                pl.BlockSpec((K, TM), lambda m: (0, m)),    # streaming im2col
                pl.BlockSpec((COP, 1), lambda m: (0, 0)),   # bias, resident
            ],
            out_specs=pl.BlockSpec((COP, TM), lambda m: (0, m)),
        ),
        compiler_params=pltpu.CompilerParams(
            dimension_semantics=("parallel",),
            vmem_limit_bytes=32 << 20),
        cost_estimate=pl.CostEstimate(
            flops=2 * COP * K * MP,
            transcendentals=0,
            bytes_accessed=COP * K * 2 + K * MP * 2 + COP * 1 * 4 + COP * MP * 4),
    )(w_pad, x_t, b_pad)

    # Slice away channel/row padding, restore NCHW.
    out = out_t[:Cout, :M].reshape(Cout, N, H, W)
    return jnp.transpose(out, (1, 0, 2, 3))


if __name__ == "__main__":
    # Small shapes consistent with the module: batch=2, in_ch=4, out_ch=3, 16x16.
    N, Cin, Cout, H, W = 2, 4, 3, 16, 16

    key = jax.random.PRNGKey(0)
    kx, kw, kb = jax.random.split(key, 3)

    x = jax.random.normal(kx, (N, Cin, H, W), dtype=jnp.float32)
    # Deterministic synthetic parameters (matching nn.Conv2d(in_ch, out_ch, 3)).
    fan_in = Cin * 3 * 3
    bound = 1.0 / (fan_in ** 0.5)
    weight = jax.random.uniform(kw, (Cout, Cin, 3, 3), jnp.float32, -bound, bound)
    bias = jax.random.uniform(kb, (Cout,), jnp.float32, -bound, bound)

    out = outconv_forward(x, weight, bias)
    out = jax.block_until_ready(out)
    assert out.shape == (N, Cout, H, W)

    # Tight check: XLA conv on the same bf16-rounded operands (apples-to-apples
    # with the bf16 MXU inputs / f32 accumulation used in the kernel).
    x_r = x.astype(jnp.bfloat16).astype(jnp.float32)
    w_r = weight.astype(jnp.bfloat16).astype(jnp.float32)
    ref_bf16 = jax.lax.conv_general_dilated(
        x_r, w_r, window_strides=(1, 1), padding=((1, 1), (1, 1)),
        dimension_numbers=("NCHW", "OIHW", "NCHW")) + bias.reshape(1, Cout, 1, 1)
    assert jnp.max(jnp.abs(out - ref_bf16)) < 2e-3

    # Loose check against the full-f32 reference (bf16 input rounding only).
    ref_f32 = jax.lax.conv_general_dilated(
        x, weight, window_strides=(1, 1), padding=((1, 1), (1, 1)),
        dimension_numbers=("NCHW", "OIHW", "NCHW")) + bias.reshape(1, Cout, 1, 1)
    assert jnp.max(jnp.abs(out - ref_f32)) < 1e-1

    print("KERNEL_OK")
</pallas_src>

<mosaic_0001>
module attributes {stable_mosaic.version = 11 : i64} {
  func.func @conv3x3_gemm_t_kernel(%arg0: i32, %arg1: memref<8x36xbf16, #tpu.memory_space<vmem>>, %arg2: memref<36x128xbf16, #tpu.memory_space<vmem>>, %arg3: memref<8x1xf32, #tpu.memory_space<vmem>>, %arg4: memref<8x128xf32, #tpu.memory_space<vmem>>) attributes {dimension_semantics = [#tpu.dimension_semantics<parallel>], iteration_bounds = array<i64: 4>, scalar_prefetch = 0 : i64, scratch_operands = 0 : i64, tpu.core_type = #tpu.core_type<tc>, window_params = [{pipeline_mode = #tpu.pipeline_mode<synchronous>, transform_indices = @transform_0, window_bounds = array<i64: 8, 36>}, {transform_indices = @transform_1, window_bounds = array<i64: 36, 128>}, {pipeline_mode = #tpu.pipeline_mode<synchronous>, transform_indices = @transform_2, window_bounds = array<i64: 8, 1>}, {transform_indices = @transform_3, window_bounds = array<i64: 8, 128>}]} {
    %c0 = arith.constant 0 : index
    %c0_0 = arith.constant 0 : index
    %0 = vector.load %arg1[%c0, %c0_0] : memref<8x36xbf16, #tpu.memory_space<vmem>>, vector<8x36xbf16>
    %c0_1 = arith.constant 0 : index
    %c0_2 = arith.constant 0 : index
    %1 = vector.load %arg2[%c0_1, %c0_2] : memref<36x128xbf16, #tpu.memory_space<vmem>>, vector<36x128xbf16>
    %cst = arith.constant dense<0.000000e+00> : vector<8x128xf32>
    %2 = tpu.matmul %0, %1, %cst {dimension_numbers = #tpu.dot_dimension_numbers<[1], [0], [0], [1], [0, 0, 1, 1], [], []>} : vector<8x36xbf16>, vector<36x128xbf16>, vector<8x128xf32> -> vector<8x128xf32>
    %c0_3 = arith.constant 0 : index
    %c0_4 = arith.constant 0 : index
    %3 = vector.load %arg3[%c0_3, %c0_4] : memref<8x1xf32, #tpu.memory_space<vmem>>, vector<8x1xf32>
    %4 = vector.broadcast %3 : vector<8x1xf32> to vector<8x128xf32>
    %5 = arith.addf %2, %4 : vector<8x128xf32>
    %c0_5 = arith.constant 0 : index
    %c0_6 = arith.constant 0 : index
    %6 = vector.load %arg4[%c0_5, %c0_6] : memref<8x128xf32, #tpu.memory_space<vmem>>, vector<8x128xf32>
    tpu.vector_store %arg4[%c0_5, %c0_6], %5 {strides = array<i32>} : memref<8x128xf32, #tpu.memory_space<vmem>>, vector<8x128xf32>,
    return
  }
  func.func @transform_0(%arg0: i32) -> (i32, i32) {
    %c0_i32 = arith.constant 0 : i32
    %c0_i32_0 = arith.constant 0 : i32
    %c0_i32_1 = arith.constant 0 : i32
    return %c0_i32, %c0_i32_0 : i32, i32
  }
  func.func @transform_1(%arg0: i32) -> (i32, i32) {
    %c0_i32 = arith.constant 0 : i32
    %c0_i32_0 = arith.constant 0 : i32
    return %c0_i32, %arg0 : i32, i32
  }
  func.func @transform_2(%arg0: i32) -> (i32, i32) {
    %c0_i32 = arith.constant 0 : i32
    %c0_i32_0 = arith.constant 0 : i32
    %c0_i32_1 = arith.constant 0 : i32
    return %c0_i32, %c0_i32_0 : i32, i32
  }
  func.func @transform_3(%arg0: i32) -> (i32, i32) {
    %c0_i32 = arith.constant 0 : i32
    %c0_i32_0 = arith.constant 0 : i32
    return %c0_i32, %arg0 : i32, i32
  }
}

</mosaic_0001>

<llo_original>
// kernel: tpu_custom_call.1
$region0: #{tpu_custom_call.1}
  #allocation0 [shape = 'u32[]', space=smem, size = 0x4, offset = 0x4, fixed_abs, tag = 'smem constant byte address 0x4 - core index']
  #allocation1 [shape = 'u32[72,128]{1,0:T(1,128)}', space=vmem, size = 0x9000, scoped, tag = 'internal scratch']
  %s0 = inlined_call_operand.vmem [shape: bf16[8,36], index: 0, kind: input, shape index: {}]
  %s1 = inlined_call_operand.hbm [shape: bf16[36,512], index: 1, kind: input, shape index: {}]
  %s2 = inlined_call_operand.vmem [shape: f32[8,1], index: 2, kind: input, shape index: {}]
  %s3 = inlined_call_operand.hbm [shape: f32[8,512], index: 3, kind: output, shape index: {}]
  %s4 = sld [smem:[#allocation0]]
  $region49: #{tpu_custom_call.1} parent=0
    _
  %s6 = ssub.s32 1, %s4
  %s7 = scalar_select 0, %s6, %s4
  $region1: #{tpu_custom_call.1} parent=0
    #allocation2 [shape = 'u8[20480]{0}', space=vmem, size = 0x5000, scoped, tag = 'input window, operand 1']
    #allocation3 [shape = 's32[2]{0}', space=sflag, size = 0x8, scoped, tag = 'scoped memory for tpu_custom_call.1']
    #allocation4 [shape = 's32[2]{0}', space=sflag, size = 0x8, scoped, tag = 'scoped memory for tpu_custom_call.1']
    #allocation5 [shape = 'u8[8192]{0}', space=vmem, size = 0x2000, scoped, tag = 'output window, operand 0']
    %8 = vsyncpa [#allocation3], 0
    %s9 = scalar_lea.sflag [#allocation3], 1
    %10 = vsyncpa %s9, 0
    %11 = vsyncpa [#allocation4], 0
    %s12 = scalar_lea.sflag [#allocation4], 1
    %13 = vsyncpa %s12, 0
    loop: start=0, step=1, limit=6
    $region2: #{tpu_custom_call.1} parent=1 // loop_pre_header
      _
    $region3: #{tpu_custom_call.1} parent=1 // loop_header
      %s15 = sphi 0, %s19
      %p16 = scmp.ge.s32.totalorder %s15, 6
      %s23 = sphi 0, %s23
      %s25 = sphi 0, %s23
      %s26 = sphi 0, %s25
      %s40 = sphi 0, %s26
      %s46 = sphi 0, %s48
      %s49 = sphi 0, %s46
      %s50 = sphi 0, %s49
      %s66 = sphi 0, %s50
      %s70 = sphi 0, %s70
      %s72 = sphi 0, %s70
      %s73 = sphi 0, %s72
      %s87 = sphi 0, %s73
      %s93 = sphi 0, %s95
      %s96 = sphi 0, %s93
      %s97 = sphi 0, %s96
      %s113 = sphi 0, %s97
    $region4: #{tpu_custom_call.1} parent=1 // loop_header_branch
      %18 = sbr.rel (%p16) target = $region8
    $region5: #{tpu_custom_call.1} parent=1 // loop_body
      %s20 = ssub.s32 %s15, 1
      %s21 = ssub.s32 %s15, 2
      %s22 = sadd.s32 %s15, 1
      %s24 = sadd.s32 %s23, 1
      %p27 = scmp.eq.s32.totalorder %s15, 3
      %p28 = scmp.ne.s32.totalorder %s23, %s25
      %p29 = scmp.eq.s32.totalorder %s15, 0
      %p30 = por %p28, %p29
      %p31 = scmp.ne.s32.totalorder %s23, %s25
      %p32 = scmp.eq.s32.totalorder %s20, 3
      %p33 = por %p31, %p32
      %p34 = scmp.ne.s32.totalorder %s25, %s26
      %p35 = scmp.eq.s32.totalorder %s20, 0
      %p36 = por %p34, %p35
      %p37 = scmp.ne.s32.totalorder %s25, %s26
      %p38 = scmp.eq.s32.totalorder %s21, 3
      %p39 = por %p37, %p38
      %p41 = scmp.ne.s32.totalorder %s26, %s40
      %p42 = scmp.eq.s32.totalorder %s21, 0
      %p43 = por %p41, %p42
      %s44 = ssub.s32 %s15, %s22
      %p45 = scmp.eq.s32.totalorder %s44, 0
      %s47 = sadd.s32 %s46, 1
      %s48 = scalar_select %p45, %s46, %s47
      %p51 = pneg %p45
      %p52 = scmp.eq.s32.totalorder %s15, 3
      %p53 = por %p51, %p52
      %p54 = scmp.ne.s32.totalorder %s46, %s49
      %p55 = scmp.eq.s32.totalorder %s15, 0
      %p56 = por %p54, %p55
      %p57 = scmp.ne.s32.totalorder %s46, %s49
      %p58 = scmp.eq.s32.totalorder %s20, 3
      %p59 = por %p57, %p58
      %p60 = scmp.ne.s32.totalorder %s49, %s50
      %p61 = scmp.eq.s32.totalorder %s20, 0
      %p62 = por %p60, %p61
      %p63 = scmp.ne.s32.totalorder %s49, %s50
      %p64 = scmp.eq.s32.totalorder %s21, 3
      %p65 = por %p63, %p64
      %p67 = scmp.ne.s32.totalorder %s50, %s66
      %p68 = scmp.eq.s32.totalorder %s21, 0
      %p69 = por %p67, %p68
      %s71 = sadd.s32 %s70, 1
      %p74 = scmp.eq.s32.totalorder %s15, 3
      %p75 = scmp.ne.s32.totalorder %s70, %s72
      %p76 = scmp.eq.s32.totalorder %s15, 0
      %p77 = por %p75, %p76
      %p78 = scmp.ne.s32.totalorder %s70, %s72
      %p79 = scmp.eq.s32.totalorder %s20, 3
      %p80 = por %p78, %p79
      %p81 = scmp.ne.s32.totalorder %s72, %s73
      %p82 = scmp.eq.s32.totalorder %s20, 0
      %p83 = por %p81, %p82
      %p84 = scmp.ne.s32.totalorder %s72, %s73
      %p85 = scmp.eq.s32.totalorder %s21, 3
      %p86 = por %p84, %p85
      %p88 = scmp.ne.s32.totalorder %s73, %s87
      %p89 = scmp.eq.s32.totalorder %s21, 0
      %p90 = por %p88, %p89
      %s91 = ssub.s32 %s15, %s22
      %p92 = scmp.eq.s32.totalorder %s91, 0
      %s94 = sadd.s32 %s93, 1
      %s95 = scalar_select %p92, %s93, %s94
      %p98 = pneg %p92
      %p99 = scmp.eq.s32.totalorder %s15, 3
      %p100 = por %p98, %p99
      %p101 = scmp.ne.s32.totalorder %s93, %s96
      %p102 = scmp.eq.s32.totalorder %s15, 0
      %p103 = por %p101, %p102
      %p104 = scmp.ne.s32.totalorder %s93, %s96
      %p105 = scmp.eq.s32.totalorder %s20, 3
      %p106 = por %p104, %p105
      %p107 = scmp.ne.s32.totalorder %s96, %s97
      %p108 = scmp.eq.s32.totalorder %s20, 0
      %p109 = por %p107, %p108
      %p110 = scmp.ne.s32.totalorder %s96, %s97
      %p111 = scmp.eq.s32.totalorder %s21, 3
      %p112 = por %p110, %p111
      %p114 = scmp.ne.s32.totalorder %s97, %s113
      %p115 = scmp.eq.s32.totalorder %s21, 0
      %p116 = por %p114, %p115
      %p117 = scmp.le.s32.totalorder 1, %s15
      %p118 = scmp.lt.s32.totalorder %s15, 5
      %p119 = pnand %p117, %p118
      %p120 = pneg %p119
      // Predicated region
      $region9: #{tpu_custom_call.1} parent=5 // pred_check
        _
      $region10: #{tpu_custom_call.1} parent=5 // pred_check_branch
        %122 = sbr.rel (%p119) target = $region12
      $region11: #{tpu_custom_call.1} parent=5 // pred_region
        %s123 = ssub.s32 %s15, 1
        // Predicated region
        $region13: #{tpu_custom_call.1} parent=11 // pred_check
          %p124 = pneg %p36
        $region14: #{tpu_custom_call.1} parent=11 // pred_check_branch
          %126 = sbr.rel (%p124) target = $region16
        $region15: #{tpu_custom_call.1} parent=11 // pred_region
          _
        $region16: #{tpu_custom_call.1} parent=11 // pred_fallthru
          _
        // Predicated region
        $region17: #{tpu_custom_call.1} parent=11 // pred_check
          %p127 = pneg %p83
        $region18: #{tpu_custom_call.1} parent=11 // pred_check_branch
          %129 = sbr.rel (%p127) target = $region20
        $region19: #{tpu_custom_call.1} parent=11 // pred_region
          _
        $region20: #{tpu_custom_call.1} parent=11 // pred_fallthru
          _
      $region12: #{tpu_custom_call.1} parent=5 // pred_fallthru
        _
      %p130 = scmp.lt.s32.totalorder %s15, 4
      // Predicated region
      $region21: #{tpu_custom_call.1} parent=5 // pred_check
        %p131 = pneg %p130
      $region22: #{tpu_custom_call.1} parent=5 // pred_check_branch
        %133 = sbr.rel (%p131) target = $region24
      $region23: #{tpu_custom_call.1} parent=5 // pred_region
        // Predicated region
        $region25: #{tpu_custom_call.1} parent=23 // pred_check
          %p134 = pneg %p56
        $region26: #{tpu_custom_call.1} parent=23 // pred_check_branch
          %136 = sbr.rel (%p134) target = $region28
        $region27: #{tpu_custom_call.1} parent=23 // pred_region
          %s137 = sand.u32 %s46, 1
          %s138 = scalar_lea.sflag [#allocation3], %s137
          %s139 = sand.u32 %s46, 1
          %s140 = smul.addr %s139, 20
          %s141 = scalar_lea.vmem [#allocation2], %s140
          %143 = vsyncadd %s138, 0
          %s144 = smul.addr %s15, 4
          %s145 = scalar_lea.hbm %s1, %s144
          %s146 = sshll.u32 %s145, 4
          %s147 = int_to_ptr.hbm [resolvable:$true] %s146
          %s148 = sshll.u32 %s141, 4
          %s149 = int_to_ptr.vmem [resolvable:$true] %s148
          %154 = dma.hbm_to_vmem [thread:$0]  %s147, 320, %s149, %s138, 256, 64, 4
        $region28: #{tpu_custom_call.1} parent=23 // pred_fallthru
          _
      $region24: #{tpu_custom_call.1} parent=5 // pred_fallthru
        _
      %p155 = scmp.le.s32.totalorder 1, %s15
      %p156 = scmp.lt.s32.totalorder %s15, 5
      %p157 = pnand %p155, %p156
      %p158 = pneg %p157
      // Predicated region
      $region29: #{tpu_custom_call.1} parent=5 // pred_check
        _
      $region30: #{tpu_custom_call.1} parent=5 // pred_check_branch
        %160 = sbr.rel (%p157) target = $region32
      $region31: #{tpu_custom_call.1} parent=5 // pred_region
        %s161 = ssub.s32 %s15, 1
        %s162 = sand.u32 %s49, 1
        %s163 = scalar_lea.sflag [#allocation3], %s162
        %s164 = sand.u32 %s49, 1
        %s165 = smul.addr %s164, 20
        %s166 = scalar_lea.vmem [#allocation2], %s165
        // Predicated region
        $region33: #{tpu_custom_call.1} parent=31 // pred_check
          %p167 = pneg %p62
        $region34: #{tpu_custom_call.1} parent=31 // pred_check_branch
          %169 = sbr.rel (%p167) target = $region36
        $region35: #{tpu_custom_call.1} parent=31 // pred_region
          %171 = dma.done %s163, 320
        $region36: #{tpu_custom_call.1} parent=31 // pred_fallthru
          _
        %p172 = pneg %p36
        %p173 = pneg %p33
        %s174 = sand.u32 %s49, 1
        %s175 = scalar_lea.sflag [#allocation3], %s174
        %s176 = sand.u32 %s49, 1
        %s177 = smul.addr %s176, 20
        %s178 = scalar_lea.vmem [#allocation2], %s177
        %p179 = pneg %p62
        %p180 = pneg %p59
        %p181 = pneg %p83
        %p182 = pneg %p80
        %p183 = pneg %p109
        %p184 = pneg %p106
        %s185 = sand.u32 %s96, 1
        %s186 = scalar_lea.sflag [#allocation4], %s185
        %s187 = sand.u32 %s96, 1
        %s188 = smul.addr %s187, 8
        %s189 = scalar_lea.vmem [#allocation5], %s188
        %v191 = vld [vmem:[%s0] sm:$0xf]
        %v192 = vld [vmem:[%s166] sm:$0xf]
        %v193 = vld [vmem:[%s166 + $0x4] sm:$0xf]
        %v194 = vld [vmem:[%s166 + $0x8] sm:$0xf]
        %v195 = vld [vmem:[%s166 + $0xc] sm:$0xf]
        %v196 = vld [vmem:[%s166 + $0x10] sm:$0x3]
        %v197 = vld [vmem:[%s2] sm:$0xff]
        %199 = vset.pattern.permute.xlu0 0
        %200 = vperm.xlu0 %199, %v197
        %v201 = vpop.permute.xlu0 %200
        %v208 = vunpack.c.l.b16 %v192
        %v209 = vunpack.c.l.b16 %v193
        %v210 = vunpack.c.l.b16 %v194
        %v211 = vunpack.c.l.b16 %v195
        %v212 = vunpack.c.l.b16 %v196
        %v213 = vpack.c.b16 %v209, %v208
        %v214 = vpack.c.b16 %v211, %v210
        %v215 = vpack.c.b16 %v212, %v212
        %vm218 = vcmask 293888
        %v220 = vsel %vm218, %v191, 0
        %vm222 = vcmask 1041408
        %v224 = vsel %vm222, %v215, 0
        %226 = vmatpush.bf16.msra.mxu0 0
        %227 = vmatpush.bf16.msra.mxu0 0
        %228 = vmatpush.bf16.msra.mxu0 0
        %229 = vmatpush.bf16.msra.mxu0 0
        %230 = vmatpush.bf16.msra.mxu0 0
        %231 = vmatpush.bf16.msra.mxu0 %v224
        %232 = vmatpush.bf16.msra.mxu0 %v214
        %233 = vmatpush.bf16.msra.mxu0 %v213
        %234 = vmatmul.bf16.gmra.mxu0 %v220
        %v235 = vpop.f32.mrf.mxu0
        %v236 = vadd.f32 %v201, %v235
        %v237 = vpop.f32.mrf.mxu0
        %238 = vdwg.mxu0
        %239 = vst [vmem:[%s189] sm:$0xff] %v236
        %s240 = sand.u32 %s96, 1
        %s241 = scalar_lea.sflag [#allocation4], %s240
        %s242 = sand.u32 %s96, 1
        %s243 = smul.addr %s242, 8
        %s244 = scalar_lea.vmem [#allocation5], %s243
        // Predicated region
        $region37: #{tpu_custom_call.1} parent=31 // pred_check
          %p245 = pneg %p106
        $region38: #{tpu_custom_call.1} parent=31 // pred_check_branch
          %247 = sbr.rel (%p245) target = $region40
        $region39: #{tpu_custom_call.1} parent=31 // pred_region
          %249 = vsyncadd %s241, 0
          %s250 = smul.addr %s20, 8
          %s251 = scalar_lea.hbm %s3, %s250
          %s253 = sshll.u32 %s244, 4
          %s254 = int_to_ptr.vmem [resolvable:$true] %s253
          %s255 = sshll.u32 %s251, 4
          %s256 = int_to_ptr.hbm [resolvable:$true] %s255
          %258 = dma.vmem_to_hbm [thread:$0]  %s254, 128, %s256, %s241
        $region40: #{tpu_custom_call.1} parent=31 // pred_fallthru
          _
      $region32: #{tpu_custom_call.1} parent=5 // pred_fallthru
        _
      %p259 = scmp.le.s32.totalorder 2, %s15
      // Predicated region
      $region41: #{tpu_custom_call.1} parent=5 // pred_check
        %p260 = pneg %p259
      $region42: #{tpu_custom_call.1} parent=5 // pred_check_branch
        %262 = sbr.rel (%p260) target = $region44
      $region43: #{tpu_custom_call.1} parent=5 // pred_region
        %s263 = ssub.s32 %s15, 2
        // Predicated region
        $region45: #{tpu_custom_call.1} parent=43 // pred_check
          %p264 = pneg %p112
        $region46: #{tpu_custom_call.1} parent=43 // pred_check_branch
          %266 = sbr.rel (%p264) target = $region48
        $region47: #{tpu_custom_call.1} parent=43 // pred_region
          %s267 = sand.u32 %s97, 1
          %s268 = scalar_lea.sflag [#allocation4], %s267
          %s269 = sand.u32 %s97, 1
          %s270 = smul.addr %s269, 8
          %s271 = scalar_lea.vmem [#allocation5], %s270
          %273 = dma.done %s268, 128
        $region48: #{tpu_custom_call.1} parent=43 // pred_fallthru
          _
      $region44: #{tpu_custom_call.1} parent=5 // pred_fallthru
        _
    $region6: #{tpu_custom_call.1} parent=1 // loop_footer
      %s19 = sadd.s32 1, %s15
    $region7: #{tpu_custom_call.1} parent=1 // loop_footer_branch
      %14 = sbr.rel target = $region3
    $region8: #{tpu_custom_call.1} parent=1 // loop_exit
      _
    %274 = vsyncpa [#allocation3], 1
    %s275 = scalar_lea.sflag [#allocation3], 1
    %276 = vsyncpa %s275, 1
    %277 = vsyncpa [#allocation4], 1
    %s278 = scalar_lea.sflag [#allocation4], 1
    %279 = vsyncpa %s278, 1

</llo_original>
